<compile_context>
chip_gen: v7x
topology: tpu7x:2x2x1
jax: 0.10.0
libtpu: 0.0.40
codegen_flags: <defaults>
</compile_context>

<pallas_src>
import functools

import jax
import jax.numpy as jnp
import numpy as np
from jax.experimental import pallas as pl
from jax.experimental.pallas import tpu as pltpu

INPUT_DIM = 4
HIDDEN_DIM = 8
NUM_LAYERS = 1   # forward below implements the single-layer case
OUTPUT_DIM = 4


def rnn_kernel(T, B, x_ref, mask_ref, wih_ref, whh_ref, brnn_ref, wfc_ref, bfc_ref,
               out_ref, hbuf_ref):
    """Whole-forward kernel on flat (T*B, .) slabs.

    x_ref    : (T*B, Din)  time-major flattened input (row t*B + b <-> step t, batch b)
    mask_ref : (T*B, 1)    f32 validity mask (1.0 where t < lengths[b])
    wih_ref  : (Din, H)    W_ih^T
    whh_ref  : (H, H)      W_hh^T
    brnn_ref : (1, H)      b_ih + b_hh
    wfc_ref  : (H, Dout)   W_fc^T
    bfc_ref  : (1, Dout)
    out_ref  : (T*B, Dout)
    hbuf_ref : (T*B, H)    f32 scratch holding every hidden state h_t
    """
    H = whh_ref.shape[0]
    w_hh = whh_ref[...]

    # 1) Input projection hoisted out of the recurrence: one batched matmul.
    xproj = (jnp.dot(x_ref[...], wih_ref[...], preferred_element_type=jnp.float32)
             + brnn_ref[...])                                   # (T*B, H)

    # 2) Serial recurrence: only the (B, H) x (H, H) recurrent dot remains per step.
    #    T is small & static -> fully unrolled; h carried as a value (vregs, no VMEM
    #    round-trip for the carry). Stores use static offsets only.
    h = jnp.zeros((B, H), jnp.float32)
    for t in range(T):
        h = jnp.tanh(xproj[t * B:(t + 1) * B, :]
                     + jnp.dot(h, w_hh, preferred_element_type=jnp.float32))
        hbuf_ref[pl.ds(t * B, B), :] = h

    # 3) Mask once over the whole hidden slab, then one fc matmul + one bulk store.
    h_masked = hbuf_ref[...] * mask_ref[...]                    # (T*B, H)
    out_ref[...] = (jnp.dot(h_masked, wfc_ref[...],
                            preferred_element_type=jnp.float32)
                    + bfc_ref[...])


def init_params(key, input_dim, hidden_dim, output_dim):
    """Deterministic init mirroring PyTorch's uniform(-1/sqrt(fan), 1/sqrt(fan))."""
    ks = jax.random.split(key, 6)
    s_rnn = 1.0 / np.sqrt(hidden_dim)
    s_fc = 1.0 / np.sqrt(hidden_dim)
    params = dict(
        w_ih=jax.random.uniform(ks[0], (hidden_dim, input_dim), jnp.float32, -s_rnn, s_rnn),
        w_hh=jax.random.uniform(ks[1], (hidden_dim, hidden_dim), jnp.float32, -s_rnn, s_rnn),
        b_ih=jax.random.uniform(ks[2], (hidden_dim,), jnp.float32, -s_rnn, s_rnn),
        b_hh=jax.random.uniform(ks[3], (hidden_dim,), jnp.float32, -s_rnn, s_rnn),
        w_fc=jax.random.uniform(ks[4], (output_dim, hidden_dim), jnp.float32, -s_fc, s_fc),
        b_fc=jax.random.uniform(ks[5], (output_dim,), jnp.float32, -s_fc, s_fc),
    )
    return params


@jax.jit
def simple_rnn_forward(x, lengths, w_ih, w_hh, b_ih, b_hh, w_fc, b_fc):
    """x: (B, T, input_dim) batch-first (PyTorch convention). Returns (B, T, output_dim)."""
    B, T, Din = x.shape
    H = w_ih.shape[0]
    Dout = w_fc.shape[0]

    # Glue: layout / weight-orientation plumbing (kept out of the kernel hot path).
    x_flat = jnp.transpose(x, (1, 0, 2)).reshape(T * B, Din).astype(jnp.float32)
    # Precomputed pad mask: mask[t, b] = (t < lengths[b]).
    mask = (lengths.astype(jnp.int32)[None, :]
            > jnp.arange(T, dtype=jnp.int32)[:, None])          # (T, B) bool
    mask_flat = mask.astype(jnp.float32).reshape(T * B, 1)
    w_ih_t = jnp.transpose(w_ih)                                # (Din, H)
    w_hh_t = jnp.transpose(w_hh)                                # (H, H)
    b_rnn = (b_ih + b_hh).reshape(1, H)
    w_fc_t = jnp.transpose(w_fc)                                # (H, Dout)
    b_fc2 = b_fc.reshape(1, Dout)

    vmem = pl.BlockSpec(memory_space=pltpu.MemorySpace.VMEM)
    out_flat = pl.pallas_call(
        functools.partial(rnn_kernel, T, B),
        out_shape=jax.ShapeDtypeStruct((T * B, Dout), jnp.float32),
        in_specs=[vmem] * 7,
        out_specs=vmem,
        scratch_shapes=[pltpu.VMEM((T * B, H), jnp.float32)],
    )(x_flat, mask_flat, w_ih_t, w_hh_t, b_rnn, w_fc_t, b_fc2)

    return jnp.transpose(out_flat.reshape(T, B, Dout), (1, 0, 2))   # (B, T, Dout)


def reference_forward(x, lengths, p):
    """Pure-JAX reference of the PyTorch forward (for correctness check)."""
    B, T, _ = x.shape
    h = jnp.zeros((B, HIDDEN_DIM), jnp.float32)
    outs = []
    for t in range(T):
        h = jnp.tanh(x[:, t, :] @ p["w_ih"].T + p["b_ih"] + h @ p["w_hh"].T + p["b_hh"])
        mask = (lengths > t)[:, None]
        outs.append(jnp.where(mask, h, 0.0))
    hidden_out = jnp.stack(outs, axis=1)                        # (B, T, H)
    return hidden_out @ p["w_fc"].T + p["b_fc"]


if __name__ == "__main__":
    key = jax.random.PRNGKey(0)
    k_x, k_p = jax.random.split(key)

    B, T = 2, 8
    x = jax.random.normal(k_x, (B, T, INPUT_DIM), jnp.float32)
    lengths = jnp.array([T, 5], dtype=jnp.int32)                # max(lengths) == T

    p = init_params(k_p, INPUT_DIM, HIDDEN_DIM, OUTPUT_DIM)

    out = simple_rnn_forward(x, lengths,
                             p["w_ih"], p["w_hh"], p["b_ih"], p["b_hh"],
                             p["w_fc"], p["b_fc"])
    out = jax.block_until_ready(out)

    ref = reference_forward(x, lengths, p)
    np.testing.assert_allclose(np.asarray(out), np.asarray(ref), rtol=1e-5, atol=1e-5)

    print("KERNEL_OK")
</pallas_src>

<mosaic_0001>
module attributes {stable_mosaic.version = 11 : i64} {
  func.func @rnn_kernel(%arg0: memref<16x4xf32, #tpu.memory_space<vmem>>, %arg1: memref<16x1xf32, #tpu.memory_space<vmem>>, %arg2: memref<4x8xf32, #tpu.memory_space<vmem>>, %arg3: memref<8x8xf32, #tpu.memory_space<vmem>>, %arg4: memref<1x8xf32, #tpu.memory_space<vmem>>, %arg5: memref<8x4xf32, #tpu.memory_space<vmem>>, %arg6: memref<1x4xf32, #tpu.memory_space<vmem>>, %arg7: memref<16x4xf32, #tpu.memory_space<vmem>>, %arg8: memref<16x8xf32, #tpu.memory_space<vmem>>) attributes {dimension_semantics = [], scalar_prefetch = 0 : i64, scratch_operands = 1 : i64, tpu.core_type = #tpu.core_type<tc>} {
    %c0 = arith.constant 0 : index
    %c0_0 = arith.constant 0 : index
    %0 = vector.load %arg3[%c0, %c0_0] : memref<8x8xf32, #tpu.memory_space<vmem>>, vector<8x8xf32>
    %c0_1 = arith.constant 0 : index
    %c0_2 = arith.constant 0 : index
    %1 = vector.load %arg0[%c0_1, %c0_2] : memref<16x4xf32, #tpu.memory_space<vmem>>, vector<16x4xf32>
    %c0_3 = arith.constant 0 : index
    %c0_4 = arith.constant 0 : index
    %2 = vector.load %arg2[%c0_3, %c0_4] : memref<4x8xf32, #tpu.memory_space<vmem>>, vector<4x8xf32>
    %cst = arith.constant dense<0.000000e+00> : vector<16x8xf32>
    %3 = tpu.matmul %1, %2, %cst {dimension_numbers = #tpu.dot_dimension_numbers<[1], [0], [0], [1], [0, 0, 1, 1], [], []>} : vector<16x4xf32>, vector<4x8xf32>, vector<16x8xf32> -> vector<16x8xf32>
    %c0_5 = arith.constant 0 : index
    %c0_6 = arith.constant 0 : index
    %4 = vector.load %arg4[%c0_5, %c0_6] : memref<1x8xf32, #tpu.memory_space<vmem>>, vector<1x8xf32>
    %5 = vector.broadcast %4 : vector<1x8xf32> to vector<16x8xf32>
    %6 = arith.addf %3, %5 : vector<16x8xf32>
    %cst_7 = arith.constant 0.000000e+00 : f32
    %7 = vector.broadcast %cst_7 : f32 to vector<2x8xf32>
    %8 = vector.extract_strided_slice %6 {offsets = [0, 0], sizes = [2, 8], strides = [1, 1]} : vector<16x8xf32> to vector<2x8xf32>
    %cst_8 = arith.constant dense<0.000000e+00> : vector<2x8xf32>
    %9 = tpu.matmul %7, %0, %cst_8 {dimension_numbers = #tpu.dot_dimension_numbers<[1], [0], [0], [1], [0, 0, 1, 1], [], []>} : vector<2x8xf32>, vector<8x8xf32>, vector<2x8xf32> -> vector<2x8xf32>
    %10 = arith.addf %8, %9 : vector<2x8xf32>
    %11 = math.tanh %10 : vector<2x8xf32>
    %c0_9 = arith.constant 0 : index
    %c0_10 = arith.constant 0 : index
    %12 = vector.load %arg8[%c0_9, %c0_10] : memref<16x8xf32, #tpu.memory_space<vmem>>, vector<2x8xf32>
    tpu.vector_store %arg8[%c0_9, %c0_10], %11 {strides = array<i32>} : memref<16x8xf32, #tpu.memory_space<vmem>>, vector<2x8xf32>,
    %13 = vector.extract_strided_slice %6 {offsets = [2, 0], sizes = [2, 8], strides = [1, 1]} : vector<16x8xf32> to vector<2x8xf32>
    %cst_11 = arith.constant dense<0.000000e+00> : vector<2x8xf32>
    %14 = tpu.matmul %11, %0, %cst_11 {dimension_numbers = #tpu.dot_dimension_numbers<[1], [0], [0], [1], [0, 0, 1, 1], [], []>} : vector<2x8xf32>, vector<8x8xf32>, vector<2x8xf32> -> vector<2x8xf32>
    %15 = arith.addf %13, %14 : vector<2x8xf32>
    %16 = math.tanh %15 : vector<2x8xf32>
    %c2 = arith.constant 2 : index
    %c0_12 = arith.constant 0 : index
    %17 = vector.load %arg8[%c2, %c0_12] : memref<16x8xf32, #tpu.memory_space<vmem>>, vector<2x8xf32>
    tpu.vector_store %arg8[%c2, %c0_12], %16 {strides = array<i32>} : memref<16x8xf32, #tpu.memory_space<vmem>>, vector<2x8xf32>,
    %18 = vector.extract_strided_slice %6 {offsets = [4, 0], sizes = [2, 8], strides = [1, 1]} : vector<16x8xf32> to vector<2x8xf32>
    %cst_13 = arith.constant dense<0.000000e+00> : vector<2x8xf32>
    %19 = tpu.matmul %16, %0, %cst_13 {dimension_numbers = #tpu.dot_dimension_numbers<[1], [0], [0], [1], [0, 0, 1, 1], [], []>} : vector<2x8xf32>, vector<8x8xf32>, vector<2x8xf32> -> vector<2x8xf32>
    %20 = arith.addf %18, %19 : vector<2x8xf32>
    %21 = math.tanh %20 : vector<2x8xf32>
    %c4 = arith.constant 4 : index
    %c0_14 = arith.constant 0 : index
    %22 = vector.load %arg8[%c4, %c0_14] : memref<16x8xf32, #tpu.memory_space<vmem>>, vector<2x8xf32>
    tpu.vector_store %arg8[%c4, %c0_14], %21 {strides = array<i32>} : memref<16x8xf32, #tpu.memory_space<vmem>>, vector<2x8xf32>,
    %23 = vector.extract_strided_slice %6 {offsets = [6, 0], sizes = [2, 8], strides = [1, 1]} : vector<16x8xf32> to vector<2x8xf32>
    %cst_15 = arith.constant dense<0.000000e+00> : vector<2x8xf32>
    %24 = tpu.matmul %21, %0, %cst_15 {dimension_numbers = #tpu.dot_dimension_numbers<[1], [0], [0], [1], [0, 0, 1, 1], [], []>} : vector<2x8xf32>, vector<8x8xf32>, vector<2x8xf32> -> vector<2x8xf32>
    %25 = arith.addf %23, %24 : vector<2x8xf32>
    %26 = math.tanh %25 : vector<2x8xf32>
    %c6 = arith.constant 6 : index
    %c0_16 = arith.constant 0 : index
    %27 = vector.load %arg8[%c6, %c0_16] : memref<16x8xf32, #tpu.memory_space<vmem>>, vector<2x8xf32>
    tpu.vector_store %arg8[%c6, %c0_16], %26 {strides = array<i32>} : memref<16x8xf32, #tpu.memory_space<vmem>>, vector<2x8xf32>,
    %28 = vector.extract_strided_slice %6 {offsets = [8, 0], sizes = [2, 8], strides = [1, 1]} : vector<16x8xf32> to vector<2x8xf32>
    %cst_17 = arith.constant dense<0.000000e+00> : vector<2x8xf32>
    %29 = tpu.matmul %26, %0, %cst_17 {dimension_numbers = #tpu.dot_dimension_numbers<[1], [0], [0], [1], [0, 0, 1, 1], [], []>} : vector<2x8xf32>, vector<8x8xf32>, vector<2x8xf32> -> vector<2x8xf32>
    %30 = arith.addf %28, %29 : vector<2x8xf32>
    %31 = math.tanh %30 : vector<2x8xf32>
    %c8 = arith.constant 8 : index
    %c0_18 = arith.constant 0 : index
    %32 = vector.load %arg8[%c8, %c0_18] : memref<16x8xf32, #tpu.memory_space<vmem>>, vector<2x8xf32>
    tpu.vector_store %arg8[%c8, %c0_18], %31 {strides = array<i32>} : memref<16x8xf32, #tpu.memory_space<vmem>>, vector<2x8xf32>,
    %33 = vector.extract_strided_slice %6 {offsets = [10, 0], sizes = [2, 8], strides = [1, 1]} : vector<16x8xf32> to vector<2x8xf32>
    %cst_19 = arith.constant dense<0.000000e+00> : vector<2x8xf32>
    %34 = tpu.matmul %31, %0, %cst_19 {dimension_numbers = #tpu.dot_dimension_numbers<[1], [0], [0], [1], [0, 0, 1, 1], [], []>} : vector<2x8xf32>, vector<8x8xf32>, vector<2x8xf32> -> vector<2x8xf32>
    %35 = arith.addf %33, %34 : vector<2x8xf32>
    %36 = math.tanh %35 : vector<2x8xf32>
    %c10 = arith.constant 10 : index
    %c0_20 = arith.constant 0 : index
    %37 = vector.load %arg8[%c10, %c0_20] : memref<16x8xf32, #tpu.memory_space<vmem>>, vector<2x8xf32>
    tpu.vector_store %arg8[%c10, %c0_20], %36 {strides = array<i32>} : memref<16x8xf32, #tpu.memory_space<vmem>>, vector<2x8xf32>,
    %38 = vector.extract_strided_slice %6 {offsets = [12, 0], sizes = [2, 8], strides = [1, 1]} : vector<16x8xf32> to vector<2x8xf32>
    %cst_21 = arith.constant dense<0.000000e+00> : vector<2x8xf32>
    %39 = tpu.matmul %36, %0, %cst_21 {dimension_numbers = #tpu.dot_dimension_numbers<[1], [0], [0], [1], [0, 0, 1, 1], [], []>} : vector<2x8xf32>, vector<8x8xf32>, vector<2x8xf32> -> vector<2x8xf32>
    %40 = arith.addf %38, %39 : vector<2x8xf32>
    %41 = math.tanh %40 : vector<2x8xf32>
    %c12 = arith.constant 12 : index
    %c0_22 = arith.constant 0 : index
    %42 = vector.load %arg8[%c12, %c0_22] : memref<16x8xf32, #tpu.memory_space<vmem>>, vector<2x8xf32>
    tpu.vector_store %arg8[%c12, %c0_22], %41 {strides = array<i32>} : memref<16x8xf32, #tpu.memory_space<vmem>>, vector<2x8xf32>,
    %43 = vector.extract_strided_slice %6 {offsets = [14, 0], sizes = [2, 8], strides = [1, 1]} : vector<16x8xf32> to vector<2x8xf32>
    %cst_23 = arith.constant dense<0.000000e+00> : vector<2x8xf32>
    %44 = tpu.matmul %41, %0, %cst_23 {dimension_numbers = #tpu.dot_dimension_numbers<[1], [0], [0], [1], [0, 0, 1, 1], [], []>} : vector<2x8xf32>, vector<8x8xf32>, vector<2x8xf32> -> vector<2x8xf32>
    %45 = arith.addf %43, %44 : vector<2x8xf32>
    %46 = math.tanh %45 : vector<2x8xf32>
    %c14 = arith.constant 14 : index
    %c0_24 = arith.constant 0 : index
    %47 = vector.load %arg8[%c14, %c0_24] : memref<16x8xf32, #tpu.memory_space<vmem>>, vector<2x8xf32>
    tpu.vector_store %arg8[%c14, %c0_24], %46 {strides = array<i32>} : memref<16x8xf32, #tpu.memory_space<vmem>>, vector<2x8xf32>,
    %c0_25 = arith.constant 0 : index
    %c0_26 = arith.constant 0 : index
    %48 = vector.load %arg8[%c0_25, %c0_26] : memref<16x8xf32, #tpu.memory_space<vmem>>, vector<16x8xf32>
    %c0_27 = arith.constant 0 : index
    %c0_28 = arith.constant 0 : index
    %49 = vector.load %arg1[%c0_27, %c0_28] : memref<16x1xf32, #tpu.memory_space<vmem>>, vector<16x1xf32>
    %50 = vector.broadcast %49 : vector<16x1xf32> to vector<16x8xf32>
    %51 = arith.mulf %48, %50 : vector<16x8xf32>
    %c0_29 = arith.constant 0 : index
    %c0_30 = arith.constant 0 : index
    %52 = vector.load %arg5[%c0_29, %c0_30] : memref<8x4xf32, #tpu.memory_space<vmem>>, vector<8x4xf32>
    %cst_31 = arith.constant dense<0.000000e+00> : vector<16x4xf32>
    %53 = tpu.matmul %51, %52, %cst_31 {dimension_numbers = #tpu.dot_dimension_numbers<[1], [0], [0], [1], [0, 0, 1, 1], [], []>} : vector<16x8xf32>, vector<8x4xf32>, vector<16x4xf32> -> vector<16x4xf32>
    %c0_32 = arith.constant 0 : index
    %c0_33 = arith.constant 0 : index
    %54 = vector.load %arg6[%c0_32, %c0_33] : memref<1x4xf32, #tpu.memory_space<vmem>>, vector<1x4xf32>
    %55 = vector.broadcast %54 : vector<1x4xf32> to vector<16x4xf32>
    %56 = arith.addf %53, %55 : vector<16x4xf32>
    %c0_34 = arith.constant 0 : index
    %c0_35 = arith.constant 0 : index
    %57 = vector.load %arg7[%c0_34, %c0_35] : memref<16x4xf32, #tpu.memory_space<vmem>>, vector<16x4xf32>
    tpu.vector_store %arg7[%c0_34, %c0_35], %56 {strides = array<i32>} : memref<16x4xf32, #tpu.memory_space<vmem>>, vector<16x4xf32>,
    return
  }
}

</mosaic_0001>

<llo_original>
// kernel: simple_rnn_forward.1
$region0: #{simple_rnn_forward.1}
  #allocation0 [shape = 'u32[]', space=smem, size = 0x4, offset = 0x4, fixed_abs, tag = 'smem constant byte address 0x4 - core index']
  #allocation1 [shape = 'u32[144,128]{1,0:T(1,128)}', space=vmem, size = 0x12000, scoped, tag = 'internal scratch']
  #allocation2 [shape = 'f32[16,8]{1,0:T(8,128)}', space=vmem, size = 0x2000, scoped, tag = 'scratch operand']
  %s0 = inlined_call_operand.vmem [shape: f32[16,4], index: 0, kind: input, shape index: {}]
  %s1 = inlined_call_operand.vmem [shape: f32[16,1], index: 1, kind: input, shape index: {}]
  %s2 = inlined_call_operand.vmem [shape: f32[4,8], index: 2, kind: input, shape index: {}]
  %s3 = inlined_call_operand.vmem [shape: f32[8,8], index: 3, kind: input, shape index: {}]
  %s4 = inlined_call_operand.vmem [shape: f32[1,8], index: 4, kind: input, shape index: {}]
  %s5 = inlined_call_operand.vmem [shape: f32[8,4], index: 5, kind: input, shape index: {}]
  %s6 = inlined_call_operand.vmem [shape: f32[1,4], index: 6, kind: input, shape index: {}]
  %s7 = inlined_call_operand.vmem [shape: f32[16,4], index: 7, kind: output, shape index: {}]
  %s8 = sld [smem:[#allocation0]]
  $region38: #{simple_rnn_forward.1} parent=0
    _
  %s10 = ssub.s32 1, %s8
  %s11 = scalar_select 0, %s10, %s8
  // Predicated region
  $region2: #{simple_rnn_forward.1} parent=0 // pred_check
    _
  $region3: #{simple_rnn_forward.1} parent=0 // pred_check_branch
    %13 = sbr.rel (0) target = $region5
  $region4: #{simple_rnn_forward.1} parent=0 // pred_region
    _
  $region5: #{simple_rnn_forward.1} parent=0 // pred_fallthru
    _
  // Predicated region
  $region6: #{simple_rnn_forward.1} parent=0 // pred_check
    _
  $region7: #{simple_rnn_forward.1} parent=0 // pred_check_branch
    %15 = sbr.rel (0) target = $region9
  $region8: #{simple_rnn_forward.1} parent=0 // pred_region
    _
  $region9: #{simple_rnn_forward.1} parent=0 // pred_fallthru
    _
  // Predicated region
  $region10: #{simple_rnn_forward.1} parent=0 // pred_check
    _
  $region11: #{simple_rnn_forward.1} parent=0 // pred_check_branch
    %17 = sbr.rel (0) target = $region13
  $region12: #{simple_rnn_forward.1} parent=0 // pred_region
    _
  $region13: #{simple_rnn_forward.1} parent=0 // pred_fallthru
    _
  // Predicated region
  $region14: #{simple_rnn_forward.1} parent=0 // pred_check
    _
  $region15: #{simple_rnn_forward.1} parent=0 // pred_check_branch
    %19 = sbr.rel (0) target = $region17
  $region16: #{simple_rnn_forward.1} parent=0 // pred_region
    _
  $region17: #{simple_rnn_forward.1} parent=0 // pred_fallthru
    _
  // Predicated region
  $region18: #{simple_rnn_forward.1} parent=0 // pred_check
    _
  $region19: #{simple_rnn_forward.1} parent=0 // pred_check_branch
    %21 = sbr.rel (0) target = $region21
  $region20: #{simple_rnn_forward.1} parent=0 // pred_region
    _
  $region21: #{simple_rnn_forward.1} parent=0 // pred_fallthru
    _
  // Predicated region
  $region22: #{simple_rnn_forward.1} parent=0 // pred_check
    _
  $region23: #{simple_rnn_forward.1} parent=0 // pred_check_branch
    %23 = sbr.rel (0) target = $region25
  $region24: #{simple_rnn_forward.1} parent=0 // pred_region
    _
  $region25: #{simple_rnn_forward.1} parent=0 // pred_fallthru
    _
  // Predicated region
  $region26: #{simple_rnn_forward.1} parent=0 // pred_check
    _
  $region27: #{simple_rnn_forward.1} parent=0 // pred_check_branch
    %25 = sbr.rel (0) target = $region29
  $region28: #{simple_rnn_forward.1} parent=0 // pred_region
    _
  $region29: #{simple_rnn_forward.1} parent=0 // pred_fallthru
    _
  %v26 = vld [vmem:[%s3] sm:$0xff]
  %v27 = vld [vmem:[%s0] sm:$0xff]
  %v28 = vld [vmem:[%s0 + $0x8] sm:$0xff]
  %v29 = vld [vmem:[%s2] sm:$0xf]
  %v30 = vld [vmem:[%s4] sm:$0x1]
  %v32 = vlaneseq
  %v33 = vshrl.u32 %v32, 7
  %v34 = vsub.s32 0, %v33
  %v35 = vrot.slane %v30, %v34
  %vm37 = vcmask 31744
  %v39 = vsel %vm37, %v27, 0
  %v42 = vsel %vm37, %v28, 0
  %vm44 = vcmask 1043456
  %v46 = vsel %vm44, %v29, 0
  %48 = vmatprep.subr.mxu0 0.0
  %49 = vmatpush1.msra.mxu0 %v46
  %50 = vmatprep.subr.mxu0 0.0
  %51 = vmatpush1.msra.mxu0 0.0
  %52 = vmatprep.subr.mxu0 0.0
  %53 = vmatpush1.msra.mxu0 0.0
  %54 = vmatprep.subr.mxu0 0.0
  %55 = vmatpush1.msra.mxu0 0.0
  %56 = vmatprep.subr.mxu0 0.0
  %57 = vmatpush1.msra.mxu0 0.0
  %58 = vmatprep.subr.mxu0 0.0
  %59 = vmatpush1.msra.mxu0 0.0
  %60 = vmatprep.subr.mxu0 0.0
  %61 = vmatpush1.msra.mxu0 0.0
  %62 = vmatprep.subr.mxu0 0.0
  %63 = vmatpush1.msra.mxu0 0.0
  %64 = vmatprep.subr.mxu0 0.0
  %65 = vmatpush1.msra.mxu0 0.0
  %66 = vmatprep.subr.mxu0 0.0
  %67 = vmatpush1.msra.mxu0 0.0
  %68 = vmatprep.subr.mxu0 0.0
  %69 = vmatpush1.msra.mxu0 0.0
  %70 = vmatprep.subr.mxu0 0.0
  %71 = vmatpush1.msra.mxu0 0.0
  %72 = vmatprep.subr.mxu0 0.0
  %73 = vmatpush1.msra.mxu0 0.0
  %74 = vmatprep.subr.mxu0 0.0
  %75 = vmatpush1.msra.mxu0 0.0
  %76 = vmatprep.subr.mxu0 0.0
  %77 = vmatpush1.msra.mxu0 0.0
  %78 = vmatprep.subr.mxu0 0.0
  %79 = vmatpush1.msra.mxu0 0.0
  %80 = vmatprep.subr.mxu0 0.0
  %81 = vmatpush1.msra.mxu0 0.0
  %82 = vmatprep.subr.mxu0 0.0
  %83 = vmatpush1.msra.mxu0 0.0
  %84 = vmatprep.subr.mxu0 0.0
  %85 = vmatpush1.msra.mxu0 0.0
  %86 = vmatprep.subr.mxu0 0.0
  %87 = vmatpush1.msra.mxu0 0.0
  %88 = vmatprep.subr.mxu0 0.0
  %89 = vmatpush1.msra.mxu0 0.0
  %90 = vmatprep.subr.mxu0 0.0
  %91 = vmatpush1.msra.mxu0 0.0
  %92 = vmatprep.subr.mxu0 0.0
  %93 = vmatpush1.msra.mxu0 0.0
  %94 = vmatprep.subr.mxu0 0.0
  %95 = vmatpush1.msra.mxu0 0.0
  %96 = vmatprep.subr.mxu0 0.0
  %97 = vmatpush1.msra.mxu0 0.0
  %98 = vmatprep.subr.mxu0 0.0
  %99 = vmatpush1.msra.mxu0 0.0
  %100 = vmatprep.subr.mxu0 0.0
  %101 = vmatpush1.msra.mxu0 0.0
  %102 = vmatprep.subr.mxu0 0.0
  %103 = vmatpush1.msra.mxu0 0.0
  %104 = vmatprep.subr.mxu0 0.0
  %105 = vmatpush1.msra.mxu0 0.0
  %106 = vmatprep.subr.mxu0 0.0
  %107 = vmatpush1.msra.mxu0 0.0
  %108 = vmatprep.subr.mxu0 0.0
  %109 = vmatpush1.msra.mxu0 0.0
  %110 = vmatprep.subr.mxu0 0.0
  %111 = vmatpush1.msra.mxu0 0.0
  %112 = vmatprep.mubr.f32.mxu0 0.0
  %113 = vmatmul.mubr.f32.gmra.mrb[0].mxu0 %v39
  %v114 = vpop.f32.mrb[0].mxu0
  %v115 = vadd.f32 %v35, %v114
  %v116 = vpop.f32.mrb[0].mxu0
  %117 = vmatprep.mubr.f32.mxu0 0.0
  %118 = vmatmul.mubr.f32.gmra.mrb[0].mxu0 %v42
  %v119 = vpop.f32.mrb[0].mxu0
  %v120 = vadd.f32 %v35, %v119
  %v121 = vpop.f32.mrb[0].mxu0
  %122 = vdwg.mxu0
  %vm123 = vcmask 64512
  %v125 = vsel %vm123, 0.0, 0
  %127 = vmatprep.subr.mxu0 0.0
  %128 = vmatpush1.msra.mxu0 %v26
  %129 = vmatprep.subr.mxu0 0.0
  %130 = vmatpush1.msra.mxu0 0.0
  %131 = vmatprep.subr.mxu0 0.0
  %132 = vmatpush1.msra.mxu0 0.0
  %133 = vmatprep.subr.mxu0 0.0
  %134 = vmatpush1.msra.mxu0 0.0
  %135 = vmatprep.subr.mxu0 0.0
  %136 = vmatpush1.msra.mxu0 0.0
  %137 = vmatprep.subr.mxu0 0.0
  %138 = vmatpush1.msra.mxu0 0.0
  %139 = vmatprep.subr.mxu0 0.0
  %140 = vmatpush1.msra.mxu0 0.0
  %141 = vmatprep.subr.mxu0 0.0
  %142 = vmatpush1.msra.mxu0 0.0
  %143 = vmatprep.subr.mxu0 0.0
  %144 = vmatpush1.msra.mxu0 0.0
  %145 = vmatprep.subr.mxu0 0.0
  %146 = vmatpush1.msra.mxu0 0.0
  %147 = vmatprep.subr.mxu0 0.0
  %148 = vmatpush1.msra.mxu0 0.0
  %149 = vmatprep.subr.mxu0 0.0
  %150 = vmatpush1.msra.mxu0 0.0
  %151 = vmatprep.subr.mxu0 0.0
  %152 = vmatpush1.msra.mxu0 0.0
  %153 = vmatprep.subr.mxu0 0.0
  %154 = vmatpush1.msra.mxu0 0.0
  %155 = vmatprep.subr.mxu0 0.0
  %156 = vmatpush1.msra.mxu0 0.0
  %157 = vmatprep.subr.mxu0 0.0
  %158 = vmatpush1.msra.mxu0 0.0
  %159 = vmatprep.subr.mxu0 0.0
  %160 = vmatpush1.msra.mxu0 0.0
  %161 = vmatprep.subr.mxu0 0.0
  %162 = vmatpush1.msra.mxu0 0.0
  %163 = vmatprep.subr.mxu0 0.0
  %164 = vmatpush1.msra.mxu0 0.0
  %165 = vmatprep.subr.mxu0 0.0
  %166 = vmatpush1.msra.mxu0 0.0
  %167 = vmatprep.subr.mxu0 0.0
  %168 = vmatpush1.msra.mxu0 0.0
  %169 = vmatprep.subr.mxu0 0.0
  %170 = vmatpush1.msra.mxu0 0.0
  %171 = vmatprep.subr.mxu0 0.0
  %172 = vmatpush1.msra.mxu0 0.0
  %173 = vmatprep.subr.mxu0 0.0
  %174 = vmatpush1.msra.mxu0 0.0
  %175 = vmatprep.subr.mxu0 0.0
  %176 = vmatpush1.msra.mxu0 0.0
  %177 = vmatprep.subr.mxu0 0.0
  %178 = vmatpush1.msra.mxu0 0.0
  %179 = vmatprep.subr.mxu0 0.0
  %180 = vmatpush1.msra.mxu0 0.0
  %181 = vmatprep.subr.mxu0 0.0
  %182 = vmatpush1.msra.mxu0 0.0
  %183 = vmatprep.subr.mxu0 0.0
  %184 = vmatpush1.msra.mxu0 0.0
  %185 = vmatprep.subr.mxu0 0.0
  %186 = vmatpush1.msra.mxu0 0.0
  %187 = vmatprep.subr.mxu0 0.0
  %188 = vmatpush1.msra.mxu0 0.0
  %189 = vmatprep.subr.mxu0 0.0
  %190 = vmatpush1.msra.mxu0 0.0
  %191 = vmatprep.mubr.f32.mxu0 0.0
  %192 = vmatmul.mubr.f32.gmra.mrb[0].mxu0 %v125
  %v193 = vpop.f32.mrb[0].mxu0
  %v194 = vadd.f32 0.0, %v193
  %v195 = vpop.f32.mrb[0].mxu0
  %196 = vdwg.mxu0
  %v197 = vadd.f32 %v115, %v194
  %v198 = vtanh.pop %v197
  %vm199 = vcmask 58368
  %200 = vst.msk [vmem:[#allocation2] sm:$0x3] %vm199, %v198
  %v202 = vsel %vm123, %v198, 0
  %204 = vmatprep.subr.mxu0 0.0
  %205 = vmatpush1.msra.mxu0 %v26
  %206 = vmatprep.subr.mxu0 0.0
  %207 = vmatpush1.msra.mxu0 0.0
  %208 = vmatprep.subr.mxu0 0.0
  %209 = vmatpush1.msra.mxu0 0.0
  %210 = vmatprep.subr.mxu0 0.0
  %211 = vmatpush1.msra.mxu0 0.0
  %212 = vmatprep.subr.mxu0 0.0
  %213 = vmatpush1.msra.mxu0 0.0
  %214 = vmatprep.subr.mxu0 0.0
  %215 = vmatpush1.msra.mxu0 0.0
  %216 = vmatprep.subr.mxu0 0.0
  %217 = vmatpush1.msra.mxu0 0.0
  %218 = vmatprep.subr.mxu0 0.0
  %219 = vmatpush1.msra.mxu0 0.0
  %220 = vmatprep.subr.mxu0 0.0
  %221 = vmatpush1.msra.mxu0 0.0
  %222 = vmatprep.subr.mxu0 0.0
  %223 = vmatpush1.msra.mxu0 0.0
  %224 = vmatprep.subr.mxu0 0.0
  %225 = vmatpush1.msra.mxu0 0.0
  %226 = vmatprep.subr.mxu0 0.0
  %227 = vmatpush1.msra.mxu0 0.0
  %228 = vmatprep.subr.mxu0 0.0
  %229 = vmatpush1.msra.mxu0 0.0
  %230 = vmatprep.subr.mxu0 0.0
  %231 = vmatpush1.msra.mxu0 0.0
  %232 = vmatprep.subr.mxu0 0.0
  %233 = vmatpush1.msra.mxu0 0.0
  %234 = vmatprep.subr.mxu0 0.0
  %235 = vmatpush1.msra.mxu0 0.0
  %236 = vmatprep.subr.mxu0 0.0
  %237 = vmatpush1.msra.mxu0 0.0
  %238 = vmatprep.subr.mxu0 0.0
  %239 = vmatpush1.msra.mxu0 0.0
  %240 = vmatprep.subr.mxu0 0.0
  %241 = vmatpush1.msra.mxu0 0.0
  %242 = vmatprep.subr.mxu0 0.0
  %243 = vmatpush1.msra.mxu0 0.0
  %244 = vmatprep.subr.mxu0 0.0
  %245 = vmatpush1.msra.mxu0 0.0
  %246 = vmatprep.subr.mxu0 0.0
  %247 = vmatpush1.msra.mxu0 0.0
  %248 = vmatprep.subr.mxu0 0.0
  %249 = vmatpush1.msra.mxu0 0.0
  %250 = vmatprep.subr.mxu0 0.0
  %251 = vmatpush1.msra.mxu0 0.0
  %252 = vmatprep.subr.mxu0 0.0
  %253 = vmatpush1.msra.mxu0 0.0
  %254 = vmatprep.subr.mxu0 0.0
  %255 = vmatpush1.msra.mxu0 0.0
  %256 = vmatprep.subr.mxu0 0.0
  %257 = vmatpush1.msra.mxu0 0.0
  %258 = vmatprep.subr.mxu0 0.0
  %259 = vmatpush1.msra.mxu0 0.0
  %260 = vmatprep.subr.mxu0 0.0
  %261 = vmatpush1.msra.mxu0 0.0
  %262 = vmatprep.subr.mxu0 0.0
  %263 = vmatpush1.msra.mxu0 0.0
  %264 = vmatprep.subr.mxu0 0.0
  %265 = vmatpush1.msra.mxu0 0.0
  %266 = vmatprep.subr.mxu0 0.0
  %267 = vmatpush1.msra.mxu0 0.0
  %268 = vmatprep.mubr.f32.mxu0 0.0
  %269 = vmatmul.mubr.f32.gmra.mrb[0].mxu0 %v202
  %v270 = vpop.f32.mrb[0].mxu0
  %v271 = vadd.f32 0.0, %v270
  %v272 = vpop.f32.mrb[0].mxu0
  %273 = vdwg.mxu0
  %v275 = vrot.slane %v271, 6
  %v277 = vadd.f32 %v115, %v275
  %v278 = vtanh.pop %v277
  %vm279 = vcmask 60418
  %280 = vst.msk [vmem:[#allocation2] sm:$0xc] %vm279, %v278
  %v282 = vrot.slane %v278, 2
  %v283 = vsel %vm123, %v282, 0
  %285 = vmatprep.subr.mxu0 0.0
  %286 = vmatpush1.msra.mxu0 %v26
  %287 = vmatprep.subr.mxu0 0.0
  %288 = vmatpush1.msra.mxu0 0.0
  %289 = vmatprep.subr.mxu0 0.0
  %290 = vmatpush1.msra.mxu0 0.0
  %291 = vmatprep.subr.mxu0 0.0
  %292 = vmatpush1.msra.mxu0 0.0
  %293 = vmatprep.subr.mxu0 0.0
  %294 = vmatpush1.msra.mxu0 0.0
  %295 = vmatprep.subr.mxu0 0.0
  %296 = vmatpush1.msra.mxu0 0.0
  %297 = vmatprep.subr.mxu0 0.0
  %298 = vmatpush1.msra.mxu0 0.0
  %299 = vmatprep.subr.mxu0 0.0
  %300 = vmatpush1.msra.mxu0 0.0
  %301 = vmatprep.subr.mxu0 0.0
  %302 = vmatpush1.msra.mxu0 0.0
  %303 = vmatprep.subr.mxu0 0.0
  %304 = vmatpush1.msra.mxu0 0.0
  %305 = vmatprep.subr.mxu0 0.0
  %306 = vmatpush1.msra.mxu0 0.0
  %307 = vmatprep.subr.mxu0 0.0
  %308 = vmatpush1.msra.mxu0 0.0
  %309 = vmatprep.subr.mxu0 0.0
  %310 = vmatpush1.msra.mxu0 0.0
  %311 = vmatprep.subr.mxu0 0.0
  %312 = vmatpush1.msra.mxu0 0.0
  %313 = vmatprep.subr.mxu0 0.0
  %314 = vmatpush1.msra.mxu0 0.0
  %315 = vmatprep.subr.mxu0 0.0
  %316 = vmatpush1.msra.mxu0 0.0
  %317 = vmatprep.subr.mxu0 0.0
  %318 = vmatpush1.msra.mxu0 0.0
  %319 = vmatprep.subr.mxu0 0.0
  %320 = vmatpush1.msra.mxu0 0.0
  %321 = vmatprep.subr.mxu0 0.0
  %322 = vmatpush1.msra.mxu0 0.0
  %323 = vmatprep.subr.mxu0 0.0
  %324 = vmatpush1.msra.mxu0 0.0
  %325 = vmatprep.subr.mxu0 0.0
  %326 = vmatpush1.msra.mxu0 0.0
  %327 = vmatprep.subr.mxu0 0.0
  %328 = vmatpush1.msra.mxu0 0.0
  %329 = vmatprep.subr.mxu0 0.0
  %330 = vmatpush1.msra.mxu0 0.0
  %331 = vmatprep.subr.mxu0 0.0
  %332 = vmatpush1.msra.mxu0 0.0
  %333 = vmatprep.subr.mxu0 0.0
  %334 = vmatpush1.msra.mxu0 0.0
  %335 = vmatprep.subr.mxu0 0.0
  %336 = vmatpush1.msra.mxu0 0.0
  %337 = vmatprep.subr.mxu0 0.0
  %338 = vmatpush1.msra.mxu0 0.0
  %339 = vmatprep.subr.mxu0 0.0
  %340 = vmatpush1.msra.mxu0 0.0
  %341 = vmatprep.subr.mxu0 0.0
  %342 = vmatpush1.msra.mxu0 0.0
  %343 = vmatprep.subr.mxu0 0.0
  %344 = vmatpush1.msra.mxu0 0.0
  %345 = vmatprep.subr.mxu0 0.0
  %346 = vmatpush1.msra.mxu0 0.0
  %347 = vmatprep.subr.mxu0 0.0
  %348 = vmatpush1.msra.mxu0 0.0
  %349 = vmatprep.mubr.f32.mxu0 0.0
  %350 = vmatmul.mubr.f32.gmra.mrb[0].mxu0 %v283
  %v351 = vpop.f32.mrb[0].mxu0
  %v352 = vadd.f32 0.0, %v351
  %v353 = vpop.f32.mrb[0].mxu0
  %354 = vdwg.mxu0
  %v356 = vrot.slane %v352, 4
  %v358 = vadd.f32 %v115, %v356
  %v359 = vtanh.pop %v358
  %vm360 = vcmask 62468
  %361 = vst.msk [vmem:[#allocation2] sm:$0x30] %vm360, %v359
  %v363 = vrot.slane %v359, 4
  %v364 = vsel %vm123, %v363, 0
  %366 = vmatprep.subr.mxu0 0.0
  %367 = vmatpush1.msra.mxu0 %v26
  %368 = vmatprep.subr.mxu0 0.0
  %369 = vmatpush1.msra.mxu0 0.0
  %370 = vmatprep.subr.mxu0 0.0
  %371 = vmatpush1.msra.mxu0 0.0
  %372 = vmatprep.subr.mxu0 0.0
  %373 = vmatpush1.msra.mxu0 0.0
  %374 = vmatprep.subr.mxu0 0.0
  %375 = vmatpush1.msra.mxu0 0.0
  %376 = vmatprep.subr.mxu0 0.0
  %377 = vmatpush1.msra.mxu0 0.0
  %378 = vmatprep.subr.mxu0 0.0
  %379 = vmatpush1.msra.mxu0 0.0
  %380 = vmatprep.subr.mxu0 0.0
  %381 = vmatpush1.msra.mxu0 0.0
  %382 = vmatprep.subr.mxu0 0.0
  %383 = vmatpush1.msra.mxu0 0.0
  %384 = vmatprep.subr.mxu0 0.0
  %385 = vmatpush1.msra.mxu0 0.0
  %386 = vmatprep.subr.mxu0 0.0
  %387 = vmatpush1.msra.mxu0 0.0
  %388 = vmatprep.subr.mxu0 0.0
  %389 = vmatpush1.msra.mxu0 0.0
  %390 = vmatprep.subr.mxu0 0.0
  %391 = vmatpush1.msra.mxu0 0.0
  %392 = vmatprep.subr.mxu0 0.0
  %393 = vmatpush1.msra.mxu0 0.0
  %394 = vmatprep.subr.mxu0 0.0
  %395 = vmatpush1.msra.mxu0 0.0
  %396 = vmatprep.subr.mxu0 0.0
  %397 = vmatpush1.msra.mxu0 0.0
  %398 = vmatprep.subr.mxu0 0.0
  %399 = vmatpush1.msra.mxu0 0.0
  %400 = vmatprep.subr.mxu0 0.0
  %401 = vmatpush1.msra.mxu0 0.0
  %402 = vmatprep.subr.mxu0 0.0
  %403 = vmatpush1.msra.mxu0 0.0
  %404 = vmatprep.subr.mxu0 0.0
  %405 = vmatpush1.msra.mxu0 0.0
  %406 = vmatprep.subr.mxu0 0.0
  %407 = vmatpush1.msra.mxu0 0.0
  %408 = vmatprep.subr.mxu0 0.0
  %409 = vmatpush1.msra.mxu0 0.0
  %410 = vmatprep.subr.mxu0 0.0
  %411 = vmatpush1.msra.mxu0 0.0
  %412 = vmatprep.subr.mxu0 0.0
  %413 = vmatpush1.msra.mxu0 0.0
  %414 = vmatprep.subr.mxu0 0.0
  %415 = vmatpush1.msra.mxu0 0.0
  %416 = vmatprep.subr.mxu0 0.0
  %417 = vmatpush1.msra.mxu0 0.0
  %418 = vmatprep.subr.mxu0 0.0
  %419 = vmatpush1.msra.mxu0 0.0
  %420 = vmatprep.subr.mxu0 0.0
  %421 = vmatpush1.msra.mxu0 0.0
  %422 = vmatprep.subr.mxu0 0.0
  %423 = vmatpush1.msra.mxu0 0.0
  %424 = vmatprep.subr.mxu0 0.0
  %425 = vmatpush1.msra.mxu0 0.0
  %426 = vmatprep.subr.mxu0 0.0
  %427 = vmatpush1.msra.mxu0 0.0
  %428 = vmatprep.subr.mxu0 0.0
  %429 = vmatpush1.msra.mxu0 0.0
  %430 = vmatprep.mubr.f32.mxu0 0.0
  %431 = vmatmul.mubr.f32.gmra.mrb[0].mxu0 %v364
  %v432 = vpop.f32.mrb[0].mxu0
  %v433 = vadd.f32 0.0, %v432
  %v434 = vpop.f32.mrb[0].mxu0
  %435 = vdwg.mxu0
  %v437 = vrot.slane %v433, 2
  %v439 = vadd.f32 %v115, %v437
  %v440 = vtanh.pop %v439
  %vm441 = vcmask 64518
  %442 = vst.msk [vmem:[#allocation2] sm:$0xc0] %vm441, %v440
  %v444 = vrot.slane %v440, 6
  %v445 = vsel %vm123, %v444, 0
  %447 = vmatprep.subr.mxu0 0.0
  %448 = vmatpush1.msra.mxu0 %v26
  %449 = vmatprep.subr.mxu0 0.0
  %450 = vmatpush1.msra.mxu0 0.0
  %451 = vmatprep.subr.mxu0 0.0
  %452 = vmatpush1.msra.mxu0 0.0
  %453 = vmatprep.subr.mxu0 0.0
  %454 = vmatpush1.msra.mxu0 0.0
  %455 = vmatprep.subr.mxu0 0.0
  %456 = vmatpush1.msra.mxu0 0.0
  %457 = vmatprep.subr.mxu0 0.0
  %458 = vmatpush1.msra.mxu0 0.0
  %459 = vmatprep.subr.mxu0 0.0
  %460 = vmatpush1.msra.mxu0 0.0
  %461 = vmatprep.subr.mxu0 0.0
  %462 = vmatpush1.msra.mxu0 0.0
  %463 = vmatprep.subr.mxu0 0.0
  %464 = vmatpush1.msra.mxu0 0.0
  %465 = vmatprep.subr.mxu0 0.0
  %466 = vmatpush1.msra.mxu0 0.0
  %467 = vmatprep.subr.mxu0 0.0
  %468 = vmatpush1.msra.mxu0 0.0
  %469 = vmatprep.subr.mxu0 0.0
  %470 = vmatpush1.msra.mxu0 0.0
  %471 = vmatprep.subr.mxu0 0.0
  %472 = vmatpush1.msra.mxu0 0.0
  %473 = vmatprep.subr.mxu0 0.0
  %474 = vmatpush1.msra.mxu0 0.0
  %475 = vmatprep.subr.mxu0 0.0
  %476 = vmatpush1.msra.mxu0 0.0
  %477 = vmatprep.subr.mxu0 0.0
  %478 = vmatpush1.msra.mxu0 0.0
  %479 = vmatprep.subr.mxu0 0.0
  %480 = vmatpush1.msra.mxu0 0.0
  %481 = vmatprep.subr.mxu0 0.0
  %482 = vmatpush1.msra.mxu0 0.0
  %483 = vmatprep.subr.mxu0 0.0
  %484 = vmatpush1.msra.mxu0 0.0
  %485 = vmatprep.subr.mxu0 0.0
  %486 = vmatpush1.msra.mxu0 0.0
  %487 = vmatprep.subr.mxu0 0.0
  %488 = vmatpush1.msra.mxu0 0.0
  %489 = vmatprep.subr.mxu0 0.0
  %490 = vmatpush1.msra.mxu0 0.0
  %491 = vmatprep.subr.mxu0 0.0
  %492 = vmatpush1.msra.mxu0 0.0
  %493 = vmatprep.subr.mxu0 0.0
  %494 = vmatpush1.msra.mxu0 0.0
  %495 = vmatprep.subr.mxu0 0.0
  %496 = vmatpush1.msra.mxu0 0.0
  %497 = vmatprep.subr.mxu0 0.0
  %498 = vmatpush1.msra.mxu0 0.0
  %499 = vmatprep.subr.mxu0 0.0
  %500 = vmatpush1.msra.mxu0 0.0
  %501 = vmatprep.subr.mxu0 0.0
  %502 = vmatpush1.msra.mxu0 0.0
  %503 = vmatprep.subr.mxu0 0.0
  %504 = vmatpush1.msra.mxu0 0.0
  %505 = vmatprep.subr.mxu0 0.0
  %506 = vmatpush1.msra.mxu0 0.0
  %507 = vmatprep.subr.mxu0 0.0
  %508 = vmatpush1.msra.mxu0 0.0
  %509 = vmatprep.subr.mxu0 0.0
  %510 = vmatpush1.msra.mxu0 0.0
  %511 = vmatprep.mubr.f32.mxu0 0.0
  %512 = vmatmul.mubr.f32.gmra.mrb[0].mxu0 %v445
  %v513 = vpop.f32.mrb[0].mxu0
  %v514 = vadd.f32 0.0, %v513
  %v515 = vpop.f32.mrb[0].mxu0
  %516 = vdwg.mxu0
  %v517 = vadd.f32 %v120, %v514
  %v518 = vtanh.pop %v517
  %519 = vst.msk [vmem:[#allocation2 + $0x8] sm:$0x3] %vm199, %v518
  %v521 = vsel %vm123, %v518, 0
  %523 = vmatprep.subr.mxu0 0.0
  %524 = vmatpush1.msra.mxu0 %v26
  %525 = vmatprep.subr.mxu0 0.0
  %526 = vmatpush1.msra.mxu0 0.0
  %527 = vmatprep.subr.mxu0 0.0
  %528 = vmatpush1.msra.mxu0 0.0
  %529 = vmatprep.subr.mxu0 0.0
  %530 = vmatpush1.msra.mxu0 0.0
  %531 = vmatprep.subr.mxu0 0.0
  %532 = vmatpush1.msra.mxu0 0.0
  %533 = vmatprep.subr.mxu0 0.0
  %534 = vmatpush1.msra.mxu0 0.0
  %535 = vmatprep.subr.mxu0 0.0
  %536 = vmatpush1.msra.mxu0 0.0
  %537 = vmatprep.subr.mxu0 0.0
  %538 = vmatpush1.msra.mxu0 0.0
  %539 = vmatprep.subr.mxu0 0.0
  %540 = vmatpush1.msra.mxu0 0.0
  %541 = vmatprep.subr.mxu0 0.0
  %542 = vmatpush1.msra.mxu0 0.0
  %543 = vmatprep.subr.mxu0 0.0
  %544 = vmatpush1.msra.mxu0 0.0
  %545 = vmatprep.subr.mxu0 0.0
  %546 = vmatpush1.msra.mxu0 0.0
  %547 = vmatprep.subr.mxu0 0.0
  %548 = vmatpush1.msra.mxu0 0.0
  %549 = vmatprep.subr.mxu0 0.0
  %550 = vmatpush1.msra.mxu0 0.0
  %551 = vmatprep.subr.mxu0 0.0
  %552 = vmatpush1.msra.mxu0 0.0
  %553 = vmatprep.subr.mxu0 0.0
  %554 = vmatpush1.msra.mxu0 0.0
  %555 = vmatprep.subr.mxu0 0.0
  %556 = vmatpush1.msra.mxu0 0.0
  %557 = vmatprep.subr.mxu0 0.0
  %558 = vmatpush1.msra.mxu0 0.0
  %559 = vmatprep.subr.mxu0 0.0
  %560 = vmatpush1.msra.mxu0 0.0
  %561 = vmatprep.subr.mxu0 0.0
  %562 = vmatpush1.msra.mxu0 0.0
  %563 = vmatprep.subr.mxu0 0.0
  %564 = vmatpush1.msra.mxu0 0.0
  %565 = vmatprep.subr.mxu0 0.0
  %566 = vmatpush1.msra.mxu0 0.0
  %567 = vmatprep.subr.mxu0 0.0
  %568 = vmatpush1.msra.mxu0 0.0
  %569 = vmatprep.subr.mxu0 0.0
  %570 = vmatpush1.msra.mxu0 0.0
  %571 = vmatprep.subr.mxu0 0.0
  %572 = vmatpush1.msra.mxu0 0.0
  %573 = vmatprep.subr.mxu0 0.0
  %574 = vmatpush1.msra.mxu0 0.0
  %575 = vmatprep.subr.mxu0 0.0
  %576 = vmatpush1.msra.mxu0 0.0
  %577 = vmatprep.subr.mxu0 0.0
  %578 = vmatpush1.msra.mxu0 0.0
  %579 = vmatprep.subr.mxu0 0.0
  %580 = vmatpush1.msra.mxu0 0.0
  %581 = vmatprep.subr.mxu0 0.0
  %582 = vmatpush1.msra.mxu0 0.0
  %583 = vmatprep.subr.mxu0 0.0
  %584 = vmatpush1.msra.mxu0 0.0
  %585 = vmatprep.subr.mxu0 0.0
  %586 = vmatpush1.msra.mxu0 0.0
  %587 = vmatprep.mubr.f32.mxu0 0.0
  %588 = vmatmul.mubr.f32.gmra.mrb[0].mxu0 %v521
  %v589 = vpop.f32.mrb[0].mxu0
  %v590 = vadd.f32 0.0, %v589
  %v591 = vpop.f32.mrb[0].mxu0
  %592 = vdwg.mxu0
  %v594 = vrot.slane %v590, 6
  %v596 = vadd.f32 %v120, %v594
  %v597 = vtanh.pop %v596
  %598 = vst.msk [vmem:[#allocation2 + $0x8] sm:$0xc] %vm279, %v597
  %v600 = vrot.slane %v597, 2
  %v601 = vsel %vm123, %v600, 0
  %603 = vmatprep.subr.mxu0 0.0
  %604 = vmatpush1.msra.mxu0 %v26
  %605 = vmatprep.subr.mxu0 0.0
  %606 = vmatpush1.msra.mxu0 0.0
  %607 = vmatprep.subr.mxu0 0.0
  %608 = vmatpush1.msra.mxu0 0.0
  %609 = vmatprep.subr.mxu0 0.0
  %610 = vmatpush1.msra.mxu0 0.0
  %611 = vmatprep.subr.mxu0 0.0
  %612 = vmatpush1.msra.mxu0 0.0
  %613 = vmatprep.subr.mxu0 0.0
  %614 = vmatpush1.msra.mxu0 0.0
  %615 = vmatprep.subr.mxu0 0.0
  %616 = vmatpush1.msra.mxu0 0.0
  %617 = vmatprep.subr.mxu0 0.0
  %618 = vmatpush1.msra.mxu0 0.0
  %619 = vmatprep.subr.mxu0 0.0
  %620 = vmatpush1.msra.mxu0 0.0
  %621 = vmatprep.subr.mxu0 0.0
  %622 = vmatpush1.msra.mxu0 0.0
  %623 = vmatprep.subr.mxu0 0.0
  %624 = vmatpush1.msra.mxu0 0.0
  %625 = vmatprep.subr.mxu0 0.0
  %626 = vmatpush1.msra.mxu0 0.0
  %627 = vmatprep.subr.mxu0 0.0
  %628 = vmatpush1.msra.mxu0 0.0
  %629 = vmatprep.subr.mxu0 0.0
  %630 = vmatpush1.msra.mxu0 0.0
  %631 = vmatprep.subr.mxu0 0.0
  %632 = vmatpush1.msra.mxu0 0.0
  %633 = vmatprep.subr.mxu0 0.0
  %634 = vmatpush1.msra.mxu0 0.0
  %635 = vmatprep.subr.mxu0 0.0
  %636 = vmatpush1.msra.mxu0 0.0
  %637 = vmatprep.subr.mxu0 0.0
  %638 = vmatpush1.msra.mxu0 0.0
  %639 = vmatprep.subr.mxu0 0.0
  %640 = vmatpush1.msra.mxu0 0.0
  %641 = vmatprep.subr.mxu0 0.0
  %642 = vmatpush1.msra.mxu0 0.0
  %643 = vmatprep.subr.mxu0 0.0
  %644 = vmatpush1.msra.mxu0 0.0
  %645 = vmatprep.subr.mxu0 0.0
  %646 = vmatpush1.msra.mxu0 0.0
  %647 = vmatprep.subr.mxu0 0.0
  %648 = vmatpush1.msra.mxu0 0.0
  %649 = vmatprep.subr.mxu0 0.0
  %650 = vmatpush1.msra.mxu0 0.0
  %651 = vmatprep.subr.mxu0 0.0
  %652 = vmatpush1.msra.mxu0 0.0
  %653 = vmatprep.subr.mxu0 0.0
  %654 = vmatpush1.msra.mxu0 0.0
  %655 = vmatprep.subr.mxu0 0.0
  %656 = vmatpush1.msra.mxu0 0.0
  %657 = vmatprep.subr.mxu0 0.0
  %658 = vmatpush1.msra.mxu0 0.0
  %659 = vmatprep.subr.mxu0 0.0
  %660 = vmatpush1.msra.mxu0 0.0
  %661 = vmatprep.subr.mxu0 0.0
  %662 = vmatpush1.msra.mxu0 0.0
  %663 = vmatprep.subr.mxu0 0.0
  %664 = vmatpush1.msra.mxu0 0.0
  %665 = vmatprep.subr.mxu0 0.0
  %666 = vmatpush1.msra.mxu0 0.0
  %667 = vmatprep.mubr.f32.mxu0 0.0
  %668 = vmatmul.mubr.f32.gmra.mrb[0].mxu0 %v601
  %v669 = vpop.f32.mrb[0].mxu0
  %v670 = vadd.f32 0.0, %v669
  %v671 = vpop.f32.mrb[0].mxu0
  %672 = vdwg.mxu0
  %v674 = vrot.slane %v670, 4
  %v676 = vadd.f32 %v120, %v674
  %v677 = vtanh.pop %v676
  %678 = vst.msk [vmem:[#allocation2 + $0x8] sm:$0x30] %vm360, %v677
  %v680 = vrot.slane %v677, 4
  %v681 = vsel %vm123, %v680, 0
  %683 = vmatprep.subr.mxu0 0.0
  %684 = vmatpush1.msra.mxu0 %v26
  %685 = vmatprep.subr.mxu0 0.0
  %686 = vmatpush1.msra.mxu0 0.0
  %687 = vmatprep.subr.mxu0 0.0
  %688 = vmatpush1.msra.mxu0 0.0
  %689 = vmatprep.subr.mxu0 0.0
  %690 = vmatpush1.msra.mxu0 0.0
  %691 = vmatprep.subr.mxu0 0.0
  %692 = vmatpush1.msra.mxu0 0.0
  %693 = vmatprep.subr.mxu0 0.0
  %694 = vmatpush1.msra.mxu0 0.0
  %695 = vmatprep.subr.mxu0 0.0
  %696 = vmatpush1.msra.mxu0 0.0
  %697 = vmatprep.subr.mxu0 0.0
  %698 = vmatpush1.msra.mxu0 0.0
  %699 = vmatprep.subr.mxu0 0.0
  %700 = vmatpush1.msra.mxu0 0.0
  %701 = vmatprep.subr.mxu0 0.0
  %702 = vmatpush1.msra.mxu0 0.0
  %703 = vmatprep.subr.mxu0 0.0
  %704 = vmatpush1.msra.mxu0 0.0
  %705 = vmatprep.subr.mxu0 0.0
  %706 = vmatpush1.msra.mxu0 0.0
  %707 = vmatprep.subr.mxu0 0.0
  %708 = vmatpush1.msra.mxu0 0.0
  %709 = vmatprep.subr.mxu0 0.0
  %710 = vmatpush1.msra.mxu0 0.0
  %711 = vmatprep.subr.mxu0 0.0
  %712 = vmatpush1.msra.mxu0 0.0
  %713 = vmatprep.subr.mxu0 0.0
  %714 = vmatpush1.msra.mxu0 0.0
  %715 = vmatprep.subr.mxu0 0.0
  %716 = vmatpush1.msra.mxu0 0.0
  %717 = vmatprep.subr.mxu0 0.0
  %718 = vmatpush1.msra.mxu0 0.0
  %719 = vmatprep.subr.mxu0 0.0
  %720 = vmatpush1.msra.mxu0 0.0
  %721 = vmatprep.subr.mxu0 0.0
  %722 = vmatpush1.msra.mxu0 0.0
  %723 = vmatprep.subr.mxu0 0.0
  %724 = vmatpush1.msra.mxu0 0.0
  %725 = vmatprep.subr.mxu0 0.0
  %726 = vmatpush1.msra.mxu0 0.0
  %727 = vmatprep.subr.mxu0 0.0
  %728 = vmatpush1.msra.mxu0 0.0
  %729 = vmatprep.subr.mxu0 0.0
  %730 = vmatpush1.msra.mxu0 0.0
  %731 = vmatprep.subr.mxu0 0.0
  %732 = vmatpush1.msra.mxu0 0.0
  %733 = vmatprep.subr.mxu0 0.0
  %734 = vmatpush1.msra.mxu0 0.0
  %735 = vmatprep.subr.mxu0 0.0
  %736 = vmatpush1.msra.mxu0 0.0
  %737 = vmatprep.subr.mxu0 0.0
  %738 = vmatpush1.msra.mxu0 0.0
  %739 = vmatprep.subr.mxu0 0.0
  %740 = vmatpush1.msra.mxu0 0.0
  %741 = vmatprep.subr.mxu0 0.0
  %742 = vmatpush1.msra.mxu0 0.0
  %743 = vmatprep.subr.mxu0 0.0
  %744 = vmatpush1.msra.mxu0 0.0
  %745 = vmatprep.subr.mxu0 0.0
  %746 = vmatpush1.msra.mxu0 0.0
  %747 = vmatprep.mubr.f32.mxu0 0.0
  %748 = vmatmul.mubr.f32.gmra.mrb[0].mxu0 %v681
  %v749 = vpop.f32.mrb[0].mxu0
  %v750 = vadd.f32 0.0, %v749
  %v751 = vpop.f32.mrb[0].mxu0
  %752 = vdwg.mxu0
  %v754 = vrot.slane %v750, 2
  %v756 = vadd.f32 %v120, %v754
  %v757 = vtanh.pop %v756
  %758 = vst.msk [vmem:[#allocation2 + $0x8] sm:$0xc0] %vm441, %v757
  %v759 = vld [vmem:[#allocation2] sm:$0xff]
  %v760 = vld [vmem:[#allocation2 + $0x8] sm:$0xff]
  %v761 = vld [vmem:[%s1] sm:$0xff]
  %v762 = vld [vmem:[%s1 + $0x8] sm:$0xff]
  %764 = vset.pattern.permute.xlu0 0
  %765 = vperm.xlu0 %764, %v761
  %v766 = vpop.permute.xlu0 %765
  %769 = vset.pattern.permute.xlu0 0
  %770 = vperm.xlu0 %769, %v762
  %v771 = vpop.permute.xlu0 %770
  %v773 = vmul.f32 %v759, %v766
  %v774 = vmul.f32 %v760, %v771
  %v775 = vld [vmem:[%s5] sm:$0xff]
  %v776 = vld [vmem:[%s6] sm:$0x1]
  %v778 = vlaneseq
  %v779 = vshrl.u32 %v778, 7
  %v780 = vsub.s32 0, %v779
  %v781 = vrot.slane %v776, %v780
  %v784 = vsel %vm123, %v773, 0
  %v787 = vsel %vm123, %v774, 0
  %789 = vmatprep.subr.mxu0 0.0
  %790 = vmatpush1.msra.mxu0 %v775
  %791 = vmatprep.subr.mxu0 0.0
  %792 = vmatpush1.msra.mxu0 0.0
  %793 = vmatprep.subr.mxu0 0.0
  %794 = vmatpush1.msra.mxu0 0.0
  %795 = vmatprep.subr.mxu0 0.0
  %796 = vmatpush1.msra.mxu0 0.0
  %797 = vmatprep.subr.mxu0 0.0
  %798 = vmatpush1.msra.mxu0 0.0
  %799 = vmatprep.subr.mxu0 0.0
  %800 = vmatpush1.msra.mxu0 0.0
  %801 = vmatprep.subr.mxu0 0.0
  %802 = vmatpush1.msra.mxu0 0.0
  %803 = vmatprep.subr.mxu0 0.0
  %804 = vmatpush1.msra.mxu0 0.0
  %805 = vmatprep.subr.mxu0 0.0
  %806 = vmatpush1.msra.mxu0 0.0
  %807 = vmatprep.subr.mxu0 0.0
  %808 = vmatpush1.msra.mxu0 0.0
  %809 = vmatprep.subr.mxu0 0.0
  %810 = vmatpush1.msra.mxu0 0.0
  %811 = vmatprep.subr.mxu0 0.0
  %812 = vmatpush1.msra.mxu0 0.0
  %813 = vmatprep.subr.mxu0 0.0
  %814 = vmatpush1.msra.mxu0 0.0
  %815 = vmatprep.subr.mxu0 0.0
  %816 = vmatpush1.msra.mxu0 0.0
  %817 = vmatprep.subr.mxu0 0.0
  %818 = vmatpush1.msra.mxu0 0.0
  %819 = vmatprep.subr.mxu0 0.0
  %820 = vmatpush1.msra.mxu0 0.0
  %821 = vmatprep.subr.mxu0 0.0
  %822 = vmatpush1.msra.mxu0 0.0
  %823 = vmatprep.subr.mxu0 0.0
  %824 = vmatpush1.msra.mxu0 0.0
  %825 = vmatprep.subr.mxu0 0.0
  %826 = vmatpush1.msra.mxu0 0.0
  %827 = vmatprep.subr.mxu0 0.0
  %828 = vmatpush1.msra.mxu0 0.0
  %829 = vmatprep.subr.mxu0 0.0
  %830 = vmatpush1.msra.mxu0 0.0
  %831 = vmatprep.subr.mxu0 0.0
  %832 = vmatpush1.msra.mxu0 0.0
  %833 = vmatprep.subr.mxu0 0.0
  %834 = vmatpush1.msra.mxu0 0.0
  %835 = vmatprep.subr.mxu0 0.0
  %836 = vmatpush1.msra.mxu0 0.0
  %837 = vmatprep.subr.mxu0 0.0
  %838 = vmatpush1.msra.mxu0 0.0
  %839 = vmatprep.subr.mxu0 0.0
  %840 = vmatpush1.msra.mxu0 0.0
  %841 = vmatprep.subr.mxu0 0.0
  %842 = vmatpush1.msra.mxu0 0.0
  %843 = vmatprep.subr.mxu0 0.0
  %844 = vmatpush1.msra.mxu0 0.0
  %845 = vmatprep.subr.mxu0 0.0
  %846 = vmatpush1.msra.mxu0 0.0
  %847 = vmatprep.subr.mxu0 0.0
  %848 = vmatpush1.msra.mxu0 0.0
  %849 = vmatprep.subr.mxu0 0.0
  %850 = vmatpush1.msra.mxu0 0.0
  %851 = vmatprep.subr.mxu0 0.0
  %852 = vmatpush1.msra.mxu0 0.0
  %853 = vmatprep.mubr.f32.mxu0 0.0
  %854 = vmatmul.mubr.f32.gmra.mrb[0].mxu0 %v784
  %v855 = vpop.f32.mrb[0].mxu0
  %v856 = vadd.f32 %v781, %v855
  %v857 = vpop.f32.mrb[0].mxu0
  %858 = vmatprep.mubr.f32.mxu0 0.0
  %859 = vmatmul.mubr.f32.gmra.mrb[0].mxu0 %v787
  %v860 = vpop.f32.mrb[0].mxu0
  %v861 = vadd.f32 %v781, %v860
  %v862 = vpop.f32.mrb[0].mxu0
  %863 = vdwg.mxu0
  %864 = vst.msk [vmem:[%s7] sm:$0xff] %vm37, %v856
  %865 = vst.msk [vmem:[%s7 + $0x8] sm:$0xff] %vm37, %v861
  // Predicated region
  $region30: #{simple_rnn_forward.1} parent=0 // pred_check
    _
  $region31: #{simple_rnn_forward.1} parent=0 // pred_check_branch
    %867 = sbr.rel (0) target = $region33
  $region32: #{simple_rnn_forward.1} parent=0 // pred_region
    _
  $region33: #{simple_rnn_forward.1} parent=0 // pred_fallthru
    _
  // Predicated region
  $region34: #{simple_rnn_forward.1} parent=0 // pred_check
    _
  $region35: #{simple_rnn_forward.1} parent=0 // pred_check_branch
    %869 = sbr.rel (0) target = $region37
  $region36: #{simple_rnn_forward.1} parent=0 // pred_region
    _
  $region37: #{simple_rnn_forward.1} parent=0 // pred_fallthru
    _

</llo_original>
